<compile_context>
chip_gen: v7x
topology: tpu7x:2x2x1
jax: 0.10.0
libtpu: 0.0.40
codegen_flags: <defaults>
</compile_context>

<pallas_src>
import functools

import jax
import jax.numpy as jnp
from jax import lax
from jax.experimental import pallas as pl
from jax.experimental.pallas import tpu as pltpu


def _attn_net_kernel(x_ref, w1t_ref, b1_ref, w2t_ref, b2_ref, o_ref):
    # x_ref  : (bn, d_in)      natural (batch-major) input tile
    # w1t_ref: (h_pad, d_in)   layer-1 weights, transposed, zero-padded rows
    # b1_ref : (h_pad, 1)
    # w2t_ref: (1, h_pad)      layer-2 weights (row), zero-padded cols
    # b2_ref : (1, 1)
    # o_ref  : (cpb, 1, cn)    chunk-major, lane-dense output tile
    cpb, _, cn = o_ref.shape
    h_pad = w1t_ref.shape[0]

    w1t = w1t_ref[...]                                   # resident weights
    w2t = w2t_ref[...]
    # Hoisted broadcasts (JAX does not CSE broadcast_in_dim inside the loop).
    b1b = jnp.broadcast_to(b1_ref[...], (h_pad, cn))
    b2b = jnp.broadcast_to(b2_ref[...], (1, cn))

    def process_chunk(c, off):
        xc = x_ref[pl.ds(off, cn), :]                    # (cn, d_in) natural layout
        # hT = W1ᵀ · xcᵀ -> (h_pad, cn): the per-chunk relayout stays in vregs
        # and batch is lane-dense for everything downstream (both matmuls on MXU).
        hT = lax.dot_general(
            w1t, xc,
            dimension_numbers=(((1,), (1,)), ((), ())),
            preferred_element_type=jnp.float32)
        hT = jnp.maximum(hT + b1b, 0.0)
        oT = jnp.dot(w2t, hT, preferred_element_type=jnp.float32)   # (1, cn)
        o_ref[c] = (oT + b2b).astype(o_ref.dtype)        # lane-dense chunk store

    if cpb <= 4:
        for c in range(cpb):                             # short: fully unroll
            process_chunk(c, c * cn)
    else:
        def body(c, carry):
            process_chunk(c, pl.multiple_of(c * cn, cn))
            return carry
        lax.fori_loop(0, cpb, body, 0, unroll=4)


def _round_up(v, m):
    return ((v + m - 1) // m) * m


@functools.partial(jax.jit, static_argnames=("block_n", "chunk_n"))
def attn_net_forward(x, w1, b1, w2, b2, *, block_n=32768, chunk_n=256):
    """Pallas forward of AttnNet.

    x : (N, 5) float32
    w1: (5, H) float32    b1: (1, H) or (H,)
    w2: (H, 1) float32    b2: (1, 1) or (1,)
    returns (N, 1) float32
    """
    n, d_in = x.shape
    h_dim = w1.shape[1]
    h_pad = _round_up(h_dim, 8)          # 100 -> 104 (sublane multiple suffices)

    n_128 = _round_up(max(n, 1), 128)

    # Batch chunk (lanes) processed per inner-loop step.
    cn = _round_up(min(chunk_n, n_128), 128)
    if n_128 >= 256:
        cn = min(cn, _round_up(n_128 // 2, 128))

    # Batch tile per grid step: as large as requested, but keep >= 2 grid steps
    # for realistic N so the "parallel" axis shards across both v7x TensorCores.
    bn = max(cn, _round_up(min(block_n, n_128), cn))
    if n_128 >= 2 * cn:
        bn = min(bn, _round_up(n_128 // 2, cn))
    cpb = bn // cn                        # chunks per grid step
    grid_n = pl.cdiv(n, bn)

    # Weight prep is O(H) — negligible.  x is passed through untouched: the
    # per-tile relayout happens in-kernel and the ragged last block relies on
    # Pallas' masked partial-block reads (garbage columns are sliced off below).
    f32 = jnp.float32
    w1t = jnp.zeros((h_pad, d_in), f32).at[:h_dim, :].set(w1.T.astype(f32))
    b1c = jnp.zeros((h_pad, 1), f32).at[:h_dim, 0].set(b1.reshape(-1).astype(f32))
    w2t = jnp.zeros((1, h_pad), f32).at[0, :h_dim].set(w2.reshape(-1).astype(f32))
    b2c = b2.reshape(1, 1).astype(f32)

    out = pl.pallas_call(
        _attn_net_kernel,
        out_shape=jax.ShapeDtypeStruct((grid_n * cpb, 1, cn), x.dtype),
        grid_spec=pltpu.PrefetchScalarGridSpec(
            num_scalar_prefetch=0,
            grid=(grid_n,),
            in_specs=[
                pl.BlockSpec((bn, d_in), lambda i: (i, 0)),      # x (natural layout)
                pl.BlockSpec((h_pad, d_in), lambda i: (0, 0)),   # W1ᵀ (resident)
                pl.BlockSpec((h_pad, 1), lambda i: (0, 0)),      # b1 column
                pl.BlockSpec((1, h_pad), lambda i: (0, 0)),      # W2ᵀ row
                pl.BlockSpec((1, 1), lambda i: (0, 0)),          # b2
            ],
            out_specs=pl.BlockSpec((cpb, 1, cn), lambda i: (i, 0, 0)),
        ),
        compiler_params=pltpu.CompilerParams(
            dimension_semantics=("parallel",),
        ),
    )(x, w1t, b1c, w2t, b2c)

    # (grid_n*cpb, 1, cn) is contiguous in batch order -> flatten + trim tail.
    return out.reshape(grid_n * cpb * cn)[:n].reshape(n, 1)


def init_params(key, hidden_size=100, in_features=5, out_features=1):
    """Deterministic init mimicking PyTorch nn.Linear defaults (uniform ±1/sqrt(fan_in))."""
    k1, k2, k3, k4 = jax.random.split(key, 4)
    bound1 = 1.0 / jnp.sqrt(in_features)
    bound2 = 1.0 / jnp.sqrt(hidden_size)
    w1 = jax.random.uniform(k1, (in_features, hidden_size), jnp.float32, -bound1, bound1)
    b1 = jax.random.uniform(k2, (1, hidden_size), jnp.float32, -bound1, bound1)
    w2 = jax.random.uniform(k3, (hidden_size, out_features), jnp.float32, -bound2, bound2)
    b2 = jax.random.uniform(k4, (1, out_features), jnp.float32, -bound2, bound2)
    return w1, b1, w2, b2


def reference_forward(x, w1, b1, w2, b2):
    h = jnp.maximum(x @ w1 + b1, 0.0)
    return h @ w2 + b2


# TODO(synk): get_sim_grad / get_cont_code_* / set_code_grad_* are training-time
# gradient-hook bookkeeping around this MLP, not part of the forward pass; they
# are intentionally not implemented as kernels.

if __name__ == "__main__":
    key = jax.random.PRNGKey(0)
    k_x1, k_x2, k_p = jax.random.split(key, 3)

    hidden_size = 100
    w1, b1, w2, b2 = init_params(k_p, hidden_size=hidden_size)

    # Case 1: ragged batch, 2 grid steps, fully-unrolled chunk path (cpb small).
    x1 = jax.random.normal(k_x1, (777, 5), jnp.float32)
    o1 = jax.block_until_ready(attn_net_forward(x1, w1, b1, w2, b2))
    r1 = reference_forward(x1, w1, b1, w2, b2)
    assert o1.shape == (777, 1), o1.shape
    assert jnp.allclose(o1, r1, atol=1e-5, rtol=1e-5), "mismatch vs reference (case 1)"

    # Case 2: larger ragged batch, exercises the fori_loop chunk path (cpb > 4).
    x2 = jax.random.normal(k_x2, (4100, 5), jnp.float32)
    o2 = jax.block_until_ready(attn_net_forward(x2, w1, b1, w2, b2))
    r2 = reference_forward(x2, w1, b1, w2, b2)
    assert o2.shape == (4100, 1), o2.shape
    assert jnp.allclose(o2, r2, atol=1e-5, rtol=1e-5), "mismatch vs reference (case 2)"

    print("KERNEL_OK")
</pallas_src>

<mosaic_0001>
module attributes {stable_mosaic.version = 11 : i64} {
  func.func @_attn_net_kernel(%arg0: i32, %arg1: memref<512x5xf32, #tpu.memory_space<vmem>>, %arg2: memref<104x5xf32, #tpu.memory_space<vmem>>, %arg3: memref<104x1xf32, #tpu.memory_space<vmem>>, %arg4: memref<1x104xf32, #tpu.memory_space<vmem>>, %arg5: memref<1x1xf32, #tpu.memory_space<vmem>>, %arg6: memref<2x1x256xf32, #tpu.memory_space<vmem>>) attributes {dimension_semantics = [#tpu.dimension_semantics<parallel>], iteration_bounds = array<i64: 2>, scalar_prefetch = 0 : i64, scratch_operands = 0 : i64, tpu.core_type = #tpu.core_type<tc>, window_params = [{transform_indices = @transform_0, window_bounds = array<i64: 512, 5>}, {pipeline_mode = #tpu.pipeline_mode<synchronous>, transform_indices = @transform_1, window_bounds = array<i64: 104, 5>}, {pipeline_mode = #tpu.pipeline_mode<synchronous>, transform_indices = @transform_2, window_bounds = array<i64: 104, 1>}, {pipeline_mode = #tpu.pipeline_mode<synchronous>, transform_indices = @transform_3, window_bounds = array<i64: 1, 104>}, {pipeline_mode = #tpu.pipeline_mode<synchronous>, transform_indices = @transform_4, window_bounds = array<i64: 1, 1>}, {transform_indices = @transform_5, window_bounds = array<i64: 2, 1, 256>}]} {
    %c0 = arith.constant 0 : index
    %c0_0 = arith.constant 0 : index
    %0 = vector.load %arg2[%c0, %c0_0] : memref<104x5xf32, #tpu.memory_space<vmem>>, vector<104x5xf32>
    %c0_1 = arith.constant 0 : index
    %c0_2 = arith.constant 0 : index
    %1 = vector.load %arg4[%c0_1, %c0_2] : memref<1x104xf32, #tpu.memory_space<vmem>>, vector<1x104xf32>
    %c0_3 = arith.constant 0 : index
    %c0_4 = arith.constant 0 : index
    %2 = vector.load %arg3[%c0_3, %c0_4] : memref<104x1xf32, #tpu.memory_space<vmem>>, vector<104x1xf32>
    %3 = vector.shape_cast %2 : vector<104x1xf32> to vector<104x1xf32>
    %4 = vector.broadcast %3 : vector<104x1xf32> to vector<104x256xf32>
    %c0_5 = arith.constant 0 : index
    %c0_6 = arith.constant 0 : index
    %5 = vector.load %arg5[%c0_5, %c0_6] : memref<1x1xf32, #tpu.memory_space<vmem>>, vector<1x1xf32>
    %6 = vector.shape_cast %5 : vector<1x1xf32> to vector<1x1xf32>
    %7 = vector.broadcast %6 : vector<1x1xf32> to vector<1x256xf32>
    %c0_7 = arith.constant 0 : index
    %c0_8 = arith.constant 0 : index
    %8 = vector.load %arg1[%c0_7, %c0_8] : memref<512x5xf32, #tpu.memory_space<vmem>>, vector<256x5xf32>
    %cst = arith.constant dense<0.000000e+00> : vector<104x256xf32>
    %9 = tpu.matmul %0, %8, %cst {dimension_numbers = #tpu.dot_dimension_numbers<[1], [1], [0], [0], [0, 0, 1, 0], [], []>} : vector<104x5xf32>, vector<256x5xf32>, vector<104x256xf32> -> vector<104x256xf32>
    %10 = arith.addf %9, %4 : vector<104x256xf32>
    %cst_9 = arith.constant 0.000000e+00 : f32
    %11 = vector.broadcast %cst_9 : f32 to vector<104x256xf32>
    %12 = arith.maximumf %10, %11 : vector<104x256xf32>
    %cst_10 = arith.constant dense<0.000000e+00> : vector<1x256xf32>
    %13 = tpu.matmul %1, %12, %cst_10 {dimension_numbers = #tpu.dot_dimension_numbers<[1], [0], [0], [1], [0, 0, 1, 1], [], []>} : vector<1x104xf32>, vector<104x256xf32>, vector<1x256xf32> -> vector<1x256xf32>
    %14 = arith.addf %13, %7 : vector<1x256xf32>
    %c0_11 = arith.constant 0 : index
    %c0_12 = arith.constant 0 : index
    %c0_13 = arith.constant 0 : index
    %15 = vector.load %arg6[%c0_11, %c0_12, %c0_13] : memref<2x1x256xf32, #tpu.memory_space<vmem>>, vector<1x1x256xf32>
    %16 = vector.shape_cast %15 : vector<1x1x256xf32> to vector<1x256xf32>
    %17 = vector.shape_cast %14 : vector<1x256xf32> to vector<1x1x256xf32>
    tpu.vector_store %arg6[%c0_11, %c0_12, %c0_13], %17 {strides = array<i32>} : memref<2x1x256xf32, #tpu.memory_space<vmem>>, vector<1x1x256xf32>,
    %c256 = arith.constant 256 : index
    %c0_14 = arith.constant 0 : index
    %18 = vector.load %arg1[%c256, %c0_14] : memref<512x5xf32, #tpu.memory_space<vmem>>, vector<256x5xf32>
    %cst_15 = arith.constant dense<0.000000e+00> : vector<104x256xf32>
    %19 = tpu.matmul %0, %18, %cst_15 {dimension_numbers = #tpu.dot_dimension_numbers<[1], [1], [0], [0], [0, 0, 1, 0], [], []>} : vector<104x5xf32>, vector<256x5xf32>, vector<104x256xf32> -> vector<104x256xf32>
    %20 = arith.addf %19, %4 : vector<104x256xf32>
    %cst_16 = arith.constant 0.000000e+00 : f32
    %21 = vector.broadcast %cst_16 : f32 to vector<104x256xf32>
    %22 = arith.maximumf %20, %21 : vector<104x256xf32>
    %cst_17 = arith.constant dense<0.000000e+00> : vector<1x256xf32>
    %23 = tpu.matmul %1, %22, %cst_17 {dimension_numbers = #tpu.dot_dimension_numbers<[1], [0], [0], [1], [0, 0, 1, 1], [], []>} : vector<1x104xf32>, vector<104x256xf32>, vector<1x256xf32> -> vector<1x256xf32>
    %24 = arith.addf %23, %7 : vector<1x256xf32>
    %c1 = arith.constant 1 : index
    %c0_18 = arith.constant 0 : index
    %c0_19 = arith.constant 0 : index
    %25 = vector.load %arg6[%c1, %c0_18, %c0_19] : memref<2x1x256xf32, #tpu.memory_space<vmem>>, vector<1x1x256xf32>
    %26 = vector.shape_cast %25 : vector<1x1x256xf32> to vector<1x256xf32>
    %27 = vector.shape_cast %24 : vector<1x256xf32> to vector<1x1x256xf32>
    tpu.vector_store %arg6[%c1, %c0_18, %c0_19], %27 {strides = array<i32>} : memref<2x1x256xf32, #tpu.memory_space<vmem>>, vector<1x1x256xf32>,
    return
  }
  func.func @transform_0(%arg0: i32) -> (i32, i32) {
    %c0_i32 = arith.constant 0 : i32
    %c0_i32_0 = arith.constant 0 : i32
    return %arg0, %c0_i32 : i32, i32
  }
  func.func @transform_1(%arg0: i32) -> (i32, i32) {
    %c0_i32 = arith.constant 0 : i32
    %c0_i32_0 = arith.constant 0 : i32
    %c0_i32_1 = arith.constant 0 : i32
    return %c0_i32, %c0_i32_0 : i32, i32
  }
  func.func @transform_2(%arg0: i32) -> (i32, i32) {
    %c0_i32 = arith.constant 0 : i32
    %c0_i32_0 = arith.constant 0 : i32
    %c0_i32_1 = arith.constant 0 : i32
    return %c0_i32, %c0_i32_0 : i32, i32
  }
  func.func @transform_3(%arg0: i32) -> (i32, i32) {
    %c0_i32 = arith.constant 0 : i32
    %c0_i32_0 = arith.constant 0 : i32
    %c0_i32_1 = arith.constant 0 : i32
    return %c0_i32, %c0_i32_0 : i32, i32
  }
  func.func @transform_4(%arg0: i32) -> (i32, i32) {
    %c0_i32 = arith.constant 0 : i32
    %c0_i32_0 = arith.constant 0 : i32
    %c0_i32_1 = arith.constant 0 : i32
    return %c0_i32, %c0_i32_0 : i32, i32
  }
  func.func @transform_5(%arg0: i32) -> (i32, i32, i32) {
    %c0_i32 = arith.constant 0 : i32
    %c0_i32_0 = arith.constant 0 : i32
    %c0_i32_1 = arith.constant 0 : i32
    return %arg0, %c0_i32, %c0_i32_0 : i32, i32, i32
  }
}

</mosaic_0001>

<llo_original>
// kernel: attn_net_forward.1
$region0: #{attn_net_forward.1}
  #allocation0 [shape = 'u32[]', space=smem, size = 0x4, offset = 0x4, fixed_abs, tag = 'smem constant byte address 0x4 - core index']
  #allocation1 [shape = 'u32[144,128]{1,0:T(1,128)}', space=vmem, size = 0x12000, scoped, tag = 'internal scratch']
  #allocation2 [shape = 'f32[1,1]{1,0:T(1,128)S(1)}', space=vmem, size = 0x200, scoped, tag = 'scoped memory for attn_net_forward.1']
  %s0 = inlined_call_operand.vmem [shape: f32[777,5], index: 0, kind: input, shape index: {}]
  %s1 = inlined_call_operand.vmem [shape: f32[104,5], index: 1, kind: input, shape index: {}]
  %s2 = inlined_call_operand.vmem [shape: f32[104,1], index: 2, kind: input, shape index: {}]
  %s3 = inlined_call_operand.vmem [shape: f32[1,104], index: 3, kind: input, shape index: {}]
  %s4 = inlined_call_operand.<no memory space> [shape: f32[1,1], index: 4, kind: input, shape index: {}]
  %s5 = inlined_call_operand.vmem [shape: f32[4,1,256], index: 5, kind: output, shape index: {}]
  %s6 = sld [smem:[#allocation0]]
  $region53: #{attn_net_forward.1} parent=0
    _
  %s8 = ssub.s32 1, %s6
  %s9 = scalar_select 0, %s8, %s6
  %v10 = vstv %s4
  %11 = vst [vmem:[#allocation2] sm:$0x1] %v10
  loop: start=0, step=1, limit=4
  $region2: #{attn_net_forward.1} parent=0 // loop_pre_header
    _
  $region3: #{attn_net_forward.1} parent=0 // loop_header
    %s13 = sphi 0, %s17
    %p14 = scmp.ge.s32.totalorder %s13, 4
    %s23 = sphi 0, %s25
    %s26 = sphi 0, %s23
    %s27 = sphi 0, %s26
    %s43 = sphi 0, %s27
    %s47 = sphi 0, %s47
    %s49 = sphi 0, %s47
    %s50 = sphi 0, %s49
    %s64 = sphi 0, %s50
    %s68 = sphi 0, %s68
    %s70 = sphi 0, %s68
    %s71 = sphi 0, %s70
    %s85 = sphi 0, %s71
    %s89 = sphi 0, %s89
    %s91 = sphi 0, %s89
    %s92 = sphi 0, %s91
    %s106 = sphi 0, %s92
    %s110 = sphi 0, %s110
    %s112 = sphi 0, %s110
    %s113 = sphi 0, %s112
    %s127 = sphi 0, %s113
    %s133 = sphi 0, %s135
    %s136 = sphi 0, %s133
    %s137 = sphi 0, %s136
    %s153 = sphi 0, %s137
  $region4: #{attn_net_forward.1} parent=0 // loop_header_branch
    %16 = sbr.rel (%p14) target = $region8
  $region5: #{attn_net_forward.1} parent=0 // loop_body
    %s18 = ssub.s32 %s13, 1
    %s19 = ssub.s32 %s13, 2
    %s20 = sadd.s32 %s13, 1
    %s21 = ssub.s32 %s13, %s20
    %p22 = scmp.eq.s32.totalorder %s21, 0
    %s24 = sadd.s32 %s23, 1
    %s25 = scalar_select %p22, %s23, %s24
    %p28 = pneg %p22
    %p29 = scmp.eq.s32.totalorder %s13, 1
    %p30 = por %p28, %p29
    %p31 = scmp.ne.s32.totalorder %s23, %s26
    %p32 = scmp.eq.s32.totalorder %s13, 0
    %p33 = por %p31, %p32
    %p34 = scmp.ne.s32.totalorder %s23, %s26
    %p35 = scmp.eq.s32.totalorder %s18, 1
    %p36 = por %p34, %p35
    %p37 = scmp.ne.s32.totalorder %s26, %s27
    %p38 = scmp.eq.s32.totalorder %s18, 0
    %p39 = por %p37, %p38
    %p40 = scmp.ne.s32.totalorder %s26, %s27
    %p41 = scmp.eq.s32.totalorder %s19, 1
    %p42 = por %p40, %p41
    %p44 = scmp.ne.s32.totalorder %s27, %s43
    %p45 = scmp.eq.s32.totalorder %s19, 0
    %p46 = por %p44, %p45
    %s48 = sadd.s32 %s47, 1
    %p51 = scmp.eq.s32.totalorder %s13, 1
    %p52 = scmp.ne.s32.totalorder %s47, %s49
    %p53 = scmp.eq.s32.totalorder %s13, 0
    %p54 = por %p52, %p53
    %p55 = scmp.ne.s32.totalorder %s47, %s49
    %p56 = scmp.eq.s32.totalorder %s18, 1
    %p57 = por %p55, %p56
    %p58 = scmp.ne.s32.totalorder %s49, %s50
    %p59 = scmp.eq.s32.totalorder %s18, 0
    %p60 = por %p58, %p59
    %p61 = scmp.ne.s32.totalorder %s49, %s50
    %p62 = scmp.eq.s32.totalorder %s19, 1
    %p63 = por %p61, %p62
    %p65 = scmp.ne.s32.totalorder %s50, %s64
    %p66 = scmp.eq.s32.totalorder %s19, 0
    %p67 = por %p65, %p66
    %s69 = sadd.s32 %s68, 1
    %p72 = scmp.eq.s32.totalorder %s13, 1
    %p73 = scmp.ne.s32.totalorder %s68, %s70
    %p74 = scmp.eq.s32.totalorder %s13, 0
    %p75 = por %p73, %p74
    %p76 = scmp.ne.s32.totalorder %s68, %s70
    %p77 = scmp.eq.s32.totalorder %s18, 1
    %p78 = por %p76, %p77
    %p79 = scmp.ne.s32.totalorder %s70, %s71
    %p80 = scmp.eq.s32.totalorder %s18, 0
    %p81 = por %p79, %p80
    %p82 = scmp.ne.s32.totalorder %s70, %s71
    %p83 = scmp.eq.s32.totalorder %s19, 1
    %p84 = por %p82, %p83
    %p86 = scmp.ne.s32.totalorder %s71, %s85
    %p87 = scmp.eq.s32.totalorder %s19, 0
    %p88 = por %p86, %p87
    %s90 = sadd.s32 %s89, 1
    %p93 = scmp.eq.s32.totalorder %s13, 1
    %p94 = scmp.ne.s32.totalorder %s89, %s91
    %p95 = scmp.eq.s32.totalorder %s13, 0
    %p96 = por %p94, %p95
    %p97 = scmp.ne.s32.totalorder %s89, %s91
    %p98 = scmp.eq.s32.totalorder %s18, 1
    %p99 = por %p97, %p98
    %p100 = scmp.ne.s32.totalorder %s91, %s92
    %p101 = scmp.eq.s32.totalorder %s18, 0
    %p102 = por %p100, %p101
    %p103 = scmp.ne.s32.totalorder %s91, %s92
    %p104 = scmp.eq.s32.totalorder %s19, 1
    %p105 = por %p103, %p104
    %p107 = scmp.ne.s32.totalorder %s92, %s106
    %p108 = scmp.eq.s32.totalorder %s19, 0
    %p109 = por %p107, %p108
    %s111 = sadd.s32 %s110, 1
    %p114 = scmp.eq.s32.totalorder %s13, 1
    %p115 = scmp.ne.s32.totalorder %s110, %s112
    %p116 = scmp.eq.s32.totalorder %s13, 0
    %p117 = por %p115, %p116
    %p118 = scmp.ne.s32.totalorder %s110, %s112
    %p119 = scmp.eq.s32.totalorder %s18, 1
    %p120 = por %p118, %p119
    %p121 = scmp.ne.s32.totalorder %s112, %s113
    %p122 = scmp.eq.s32.totalorder %s18, 0
    %p123 = por %p121, %p122
    %p124 = scmp.ne.s32.totalorder %s112, %s113
    %p125 = scmp.eq.s32.totalorder %s19, 1
    %p126 = por %p124, %p125
    %p128 = scmp.ne.s32.totalorder %s113, %s127
    %p129 = scmp.eq.s32.totalorder %s19, 0
    %p130 = por %p128, %p129
    %s131 = ssub.s32 %s13, %s20
    %p132 = scmp.eq.s32.totalorder %s131, 0
    %s134 = sadd.s32 %s133, 1
    %s135 = scalar_select %p132, %s133, %s134
    %p138 = pneg %p132
    %p139 = scmp.eq.s32.totalorder %s13, 1
    %p140 = por %p138, %p139
    %p141 = scmp.ne.s32.totalorder %s133, %s136
    %p142 = scmp.eq.s32.totalorder %s13, 0
    %p143 = por %p141, %p142
    %p144 = scmp.ne.s32.totalorder %s133, %s136
    %p145 = scmp.eq.s32.totalorder %s18, 1
    %p146 = por %p144, %p145
    %p147 = scmp.ne.s32.totalorder %s136, %s137
    %p148 = scmp.eq.s32.totalorder %s18, 0
    %p149 = por %p147, %p148
    %p150 = scmp.ne.s32.totalorder %s136, %s137
    %p151 = scmp.eq.s32.totalorder %s19, 1
    %p152 = por %p150, %p151
    %p154 = scmp.ne.s32.totalorder %s137, %s153
    %p155 = scmp.eq.s32.totalorder %s19, 0
    %p156 = por %p154, %p155
    %p157 = scmp.le.s32.totalorder 1, %s13
    %p158 = scmp.lt.s32.totalorder %s13, 3
    %p159 = pnand %p157, %p158
    %p160 = pneg %p159
    // Predicated region
    $region9: #{attn_net_forward.1} parent=5 // pred_check
      _
    $region10: #{attn_net_forward.1} parent=5 // pred_check_branch
      %162 = sbr.rel (%p159) target = $region12
    $region11: #{attn_net_forward.1} parent=5 // pred_region
      %s163 = ssub.s32 %s13, 1
      // Predicated region
      $region13: #{attn_net_forward.1} parent=11 // pred_check
        %p164 = pneg %p60
      $region14: #{attn_net_forward.1} parent=11 // pred_check_branch
        %166 = sbr.rel (%p164) target = $region16
      $region15: #{attn_net_forward.1} parent=11 // pred_region
        _
      $region16: #{attn_net_forward.1} parent=11 // pred_fallthru
        _
      // Predicated region
      $region17: #{attn_net_forward.1} parent=11 // pred_check
        %p167 = pneg %p81
      $region18: #{attn_net_forward.1} parent=11 // pred_check_branch
        %169 = sbr.rel (%p167) target = $region20
      $region19: #{attn_net_forward.1} parent=11 // pred_region
        _
      $region20: #{attn_net_forward.1} parent=11 // pred_fallthru
        _
      // Predicated region
      $region21: #{attn_net_forward.1} parent=11 // pred_check
        %p170 = pneg %p102
      $region22: #{attn_net_forward.1} parent=11 // pred_check_branch
        %172 = sbr.rel (%p170) target = $region24
      $region23: #{attn_net_forward.1} parent=11 // pred_region
        _
      $region24: #{attn_net_forward.1} parent=11 // pred_fallthru
        _
      // Predicated region
      $region25: #{attn_net_forward.1} parent=11 // pred_check
        %p173 = pneg %p123
      $region26: #{attn_net_forward.1} parent=11 // pred_check_branch
        %175 = sbr.rel (%p173) target = $region28
      $region27: #{attn_net_forward.1} parent=11 // pred_region
        _
      $region28: #{attn_net_forward.1} parent=11 // pred_fallthru
        _
    $region12: #{attn_net_forward.1} parent=5 // pred_fallthru
      _
    %p176 = scmp.lt.s32.totalorder %s13, 2
    // Predicated region
    $region29: #{attn_net_forward.1} parent=5 // pred_check
      %p177 = pneg %p176
    $region30: #{attn_net_forward.1} parent=5 // pred_check_branch
      %179 = sbr.rel (%p177) target = $region32
    $region31: #{attn_net_forward.1} parent=5 // pred_region
      // Predicated region
      $region33: #{attn_net_forward.1} parent=31 // pred_check
        %p180 = pneg %p33
      $region34: #{attn_net_forward.1} parent=31 // pred_check_branch
        %182 = sbr.rel (%p180) target = $region36
      $region35: #{attn_net_forward.1} parent=31 // pred_region
        %s183 = smul.u32 64, %s13
        %s184 = ssub.s32 98, %s183
        %p185 = scmp.lt.s32.totalorder %s184, 64
        %s186 = scalar_select %p185, %s184, 64
        %s187 = smul.u32 128, %s186
        %p188 = scmp.lt.s32.totalorder %s183, 97
        %s189 = scalar_select %p188, %s183, 97
        %s190 = smul.addr %s189, 8
        %s191 = scalar_lea.vmem %s0, %s190
        %s192 = smul.u32 64, %s13
        %s193 = ssub.s32 98, %s192
        %p194 = scmp.lt.s32.totalorder %s193, 64
        %s195 = scalar_select %p194, %s193, 64
        %s196 = smul.u32 128, %s195
      $region36: #{attn_net_forward.1} parent=31 // pred_fallthru
        _
    $region32: #{attn_net_forward.1} parent=5 // pred_fallthru
      _
    %p197 = scmp.le.s32.totalorder 1, %s13
    %p198 = scmp.lt.s32.totalorder %s13, 3
    %p199 = pnand %p197, %p198
    %p200 = pneg %p199
    // Predicated region
    $region37: #{attn_net_forward.1} parent=5 // pred_check
      _
    $region38: #{attn_net_forward.1} parent=5 // pred_check_branch
      %202 = sbr.rel (%p199) target = $region40
    $region39: #{attn_net_forward.1} parent=5 // pred_region
      %s203 = ssub.s32 %s13, 1
      %s204 = smul.u32 64, %s18
      %s205 = ssub.s32 98, %s204
      %p206 = scmp.lt.s32.totalorder %s205, 64
      %s207 = scalar_select %p206, %s205, 64
      %s208 = smul.u32 128, %s207
      %p209 = scmp.lt.s32.totalorder %s204, 97
      %s210 = scalar_select %p209, %s204, 97
      %s211 = smul.addr %s210, 8
      %s212 = scalar_lea.vmem %s0, %s211
      %p213 = pneg %p39
      %p214 = pneg %p36
      %p215 = pneg %p60
      %p216 = pneg %p57
      %p217 = pneg %p81
      %p218 = pneg %p78
      %p219 = pneg %p102
      %p220 = pneg %p99
      %p221 = pneg %p123
      %p222 = pneg %p120
      %p223 = pneg %p149
      %p224 = pneg %p146
      %s225 = smul.u32 2, %s18
      %p226 = scmp.lt.s32.totalorder %s225, 3
      %s227 = scalar_select %p226, %s225, 3
      %s228 = smul.addr %s227, 2
      %s229 = scalar_lea.vmem %s5, %s228
      %s230 = smul.u32 64, %s18
      %s231 = ssub.s32 98, %s230
      %p232 = scmp.lt.s32.totalorder %s231, 64
      %s233 = scalar_select %p232, %s231, 64
      %s234 = smul.u32 128, %s233
      %p235 = scmp.lt.s32.totalorder %s230, 97
      %s236 = scalar_select %p235, %s230, 97
      %s237 = smul.addr %s236, 8
      %s238 = scalar_lea.vmem %s0, %s237
      %s239 = smul.u32 64, %s18
      %s240 = ssub.s32 98, %s239
      %p241 = scmp.lt.s32.totalorder %s240, 64
      %s242 = scalar_select %p241, %s240, 64
      %s243 = smul.u32 128, %s242
      %s244 = smul.u32 2, %s18
      %p245 = scmp.lt.s32.totalorder %s244, 3
      %s246 = scalar_select %p245, %s244, 3
      %s247 = smul.addr %s246, 2
      %s248 = scalar_lea.vmem %s5, %s247
      %s249 = smul.u32 2, %s18
      %v250 = vld [vmem:[%s1] sm:$0xff]
      %v251 = vld [vmem:[%s1 + $0x8] sm:$0xff]
      %v252 = vld [vmem:[%s1 + $0x10] sm:$0xff]
      %v253 = vld [vmem:[%s1 + $0x18] sm:$0xff]
      %v254 = vld [vmem:[%s1 + $0x20] sm:$0xff]
      %v255 = vld [vmem:[%s1 + $0x28] sm:$0xff]
      %v256 = vld [vmem:[%s1 + $0x30] sm:$0xff]
      %v257 = vld [vmem:[%s1 + $0x38] sm:$0xff]
      %v258 = vld [vmem:[%s1 + $0x40] sm:$0xff]
      %v259 = vld [vmem:[%s1 + $0x48] sm:$0xff]
      %v260 = vld [vmem:[%s1 + $0x50] sm:$0xff]
      %v261 = vld [vmem:[%s1 + $0x58] sm:$0xff]
      %v262 = vld [vmem:[%s1 + $0x60] sm:$0xff]
      %v263 = vld [vmem:[%s3] sm:$0x1]
      %v264 = vld [vmem:[%s2] sm:$0xff]
      %v265 = vld [vmem:[%s2 + $0x8] sm:$0xff]
      %v266 = vld [vmem:[%s2 + $0x10] sm:$0xff]
      %v267 = vld [vmem:[%s2 + $0x18] sm:$0xff]
      %v268 = vld [vmem:[%s2 + $0x20] sm:$0xff]
      %v269 = vld [vmem:[%s2 + $0x28] sm:$0xff]
      %v270 = vld [vmem:[%s2 + $0x30] sm:$0xff]
      %v271 = vld [vmem:[%s2 + $0x38] sm:$0xff]
      %v272 = vld [vmem:[%s2 + $0x40] sm:$0xff]
      %v273 = vld [vmem:[%s2 + $0x48] sm:$0xff]
      %v274 = vld [vmem:[%s2 + $0x50] sm:$0xff]
      %v275 = vld [vmem:[%s2 + $0x58] sm:$0xff]
      %v276 = vld [vmem:[%s2 + $0x60] sm:$0xff]
      %278 = vset.pattern.permute.xlu0 0
      %279 = vperm.xlu0 %278, %v264
      %v280 = vpop.permute.xlu0 %279
      %283 = vset.pattern.permute.xlu0 0
      %284 = vperm.xlu0 %283, %v265
      %v285 = vpop.permute.xlu0 %284
      %288 = vset.pattern.permute.xlu0 0
      %289 = vperm.xlu0 %288, %v266
      %v290 = vpop.permute.xlu0 %289
      %293 = vset.pattern.permute.xlu0 0
      %294 = vperm.xlu0 %293, %v267
      %v295 = vpop.permute.xlu0 %294
      %298 = vset.pattern.permute.xlu0 0
      %299 = vperm.xlu0 %298, %v268
      %v300 = vpop.permute.xlu0 %299
      %303 = vset.pattern.permute.xlu0 0
      %304 = vperm.xlu0 %303, %v269
      %v305 = vpop.permute.xlu0 %304
      %308 = vset.pattern.permute.xlu0 0
      %309 = vperm.xlu0 %308, %v270
      %v310 = vpop.permute.xlu0 %309
      %313 = vset.pattern.permute.xlu0 0
      %314 = vperm.xlu0 %313, %v271
      %v315 = vpop.permute.xlu0 %314
      %318 = vset.pattern.permute.xlu0 0
      %319 = vperm.xlu0 %318, %v272
      %v320 = vpop.permute.xlu0 %319
      %323 = vset.pattern.permute.xlu0 0
      %324 = vperm.xlu0 %323, %v273
      %v325 = vpop.permute.xlu0 %324
      %328 = vset.pattern.permute.xlu0 0
      %329 = vperm.xlu0 %328, %v274
      %v330 = vpop.permute.xlu0 %329
      %333 = vset.pattern.permute.xlu0 0
      %334 = vperm.xlu0 %333, %v275
      %v335 = vpop.permute.xlu0 %334
      %338 = vset.pattern.permute.xlu0 0
      %339 = vperm.xlu0 %338, %v276
      %v340 = vpop.permute.xlu0 %339
      %v342 = vld [vmem:[#allocation2] sm:$0x1]
      %344 = vset.pattern.permute.xlu0 0
      %345 = vperm.xlu0 %344, %v342
      %v346 = vpop.permute.xlu0 %345
      %v348 = vlaneseq
      %v349 = vshrl.u32 %v348, 7
      %v350 = vsub.s32 0, %v349
      %v351 = vrot.slane %v346, %v350
      %v352 = vld [vmem:[%s238] sm:$0xff]
      %v353 = vld [vmem:[%s238 + $0x8] sm:$0xff]
      %v354 = vld [vmem:[%s238 + $0x10] sm:$0xff]
      %v355 = vld [vmem:[%s238 + $0x18] sm:$0xff]
      %v356 = vld [vmem:[%s238 + $0x20] sm:$0xff]
      %v357 = vld [vmem:[%s238 + $0x28] sm:$0xff]
      %v358 = vld [vmem:[%s238 + $0x30] sm:$0xff]
      %v359 = vld [vmem:[%s238 + $0x38] sm:$0xff]
      %v360 = vld [vmem:[%s238 + $0x40] sm:$0xff]
      %v361 = vld [vmem:[%s238 + $0x48] sm:$0xff]
      %v362 = vld [vmem:[%s238 + $0x50] sm:$0xff]
      %v363 = vld [vmem:[%s238 + $0x58] sm:$0xff]
      %v364 = vld [vmem:[%s238 + $0x60] sm:$0xff]
      %v365 = vld [vmem:[%s238 + $0x68] sm:$0xff]
      %v366 = vld [vmem:[%s238 + $0x70] sm:$0xff]
      %v367 = vld [vmem:[%s238 + $0x78] sm:$0xff]
      %v368 = vld [vmem:[%s238 + $0x80] sm:$0xff]
      %v369 = vld [vmem:[%s238 + $0x88] sm:$0xff]
      %v370 = vld [vmem:[%s238 + $0x90] sm:$0xff]
      %v371 = vld [vmem:[%s238 + $0x98] sm:$0xff]
      %v372 = vld [vmem:[%s238 + $0xa0] sm:$0xff]
      %v373 = vld [vmem:[%s238 + $0xa8] sm:$0xff]
      %v374 = vld [vmem:[%s238 + $0xb0] sm:$0xff]
      %v375 = vld [vmem:[%s238 + $0xb8] sm:$0xff]
      %v376 = vld [vmem:[%s238 + $0xc0] sm:$0xff]
      %v377 = vld [vmem:[%s238 + $0xc8] sm:$0xff]
      %v378 = vld [vmem:[%s238 + $0xd0] sm:$0xff]
      %v379 = vld [vmem:[%s238 + $0xd8] sm:$0xff]
      %v380 = vld [vmem:[%s238 + $0xe0] sm:$0xff]
      %v381 = vld [vmem:[%s238 + $0xe8] sm:$0xff]
      %v382 = vld [vmem:[%s238 + $0xf0] sm:$0xff]
      %v383 = vld [vmem:[%s238 + $0xf8] sm:$0xff]
      %vm384 = vcmask 39936
      %v386 = vsel %vm384, %v250, 0
      %v389 = vsel %vm384, %v251, 0
      %v392 = vsel %vm384, %v252, 0
      %v395 = vsel %vm384, %v253, 0
      %v398 = vsel %vm384, %v254, 0
      %v401 = vsel %vm384, %v255, 0
      %v404 = vsel %vm384, %v256, 0
      %v407 = vsel %vm384, %v257, 0
      %v410 = vsel %vm384, %v258, 0
      %v413 = vsel %vm384, %v259, 0
      %v416 = vsel %vm384, %v260, 0
      %v419 = vsel %vm384, %v261, 0
      %v422 = vsel %vm384, %v262, 0
      %v425 = vsel %vm384, %v352, 0
      %v428 = vsel %vm384, %v353, 0
      %v431 = vsel %vm384, %v354, 0
      %v434 = vsel %vm384, %v355, 0
      %v437 = vsel %vm384, %v356, 0
      %v440 = vsel %vm384, %v357, 0
      %v443 = vsel %vm384, %v358, 0
      %v446 = vsel %vm384, %v359, 0
      %v449 = vsel %vm384, %v360, 0
      %v452 = vsel %vm384, %v361, 0
      %v455 = vsel %vm384, %v362, 0
      %v458 = vsel %vm384, %v363, 0
      %v461 = vsel %vm384, %v364, 0
      %v464 = vsel %vm384, %v365, 0
      %v467 = vsel %vm384, %v366, 0
      %v470 = vsel %vm384, %v367, 0
      %v473 = vsel %vm384, %v368, 0
      %v476 = vsel %vm384, %v369, 0
      %v479 = vsel %vm384, %v370, 0
      %v482 = vsel %vm384, %v371, 0
      %v485 = vsel %vm384, %v372, 0
      %v488 = vsel %vm384, %v373, 0
      %v491 = vsel %vm384, %v374, 0
      %v494 = vsel %vm384, %v375, 0
      %v497 = vsel %vm384, %v376, 0
      %v500 = vsel %vm384, %v377, 0
      %v503 = vsel %vm384, %v378, 0
      %v506 = vsel %vm384, %v379, 0
      %v509 = vsel %vm384, %v380, 0
      %v512 = vsel %vm384, %v381, 0
      %v515 = vsel %vm384, %v382, 0
      %v518 = vsel %vm384, %v383, 0
      %520 = vmatprep.subr.mxu0 0.0
      %521 = vmatpush1.xpose.msra.mxu0 %v425
      %522 = vmatprep.subr.mxu0 0.0
      %523 = vmatpush1.xpose.msra.mxu0 %v428
      %524 = vmatprep.subr.mxu0 0.0
      %525 = vmatpush1.xpose.msra.mxu0 %v431
      %526 = vmatprep.subr.mxu0 0.0
      %527 = vmatpush1.xpose.msra.mxu0 %v434
      %528 = vmatprep.subr.mxu0 0.0
      %529 = vmatpush1.xpose.msra.mxu0 %v437
      %530 = vmatprep.subr.mxu0 0.0
      %531 = vmatpush1.xpose.msra.mxu0 %v440
      %532 = vmatprep.subr.mxu0 0.0
      %533 = vmatpush1.xpose.msra.mxu0 %v443
      %534 = vmatprep.subr.mxu0 0.0
      %535 = vmatpush1.xpose.msra.mxu0 %v446
      %536 = vmatprep.subr.mxu0 0.0
      %537 = vmatpush1.xpose.msra.mxu0 %v449
      %538 = vmatprep.subr.mxu0 0.0
      %539 = vmatpush1.xpose.msra.mxu0 %v452
      %540 = vmatprep.subr.mxu0 0.0
      %541 = vmatpush1.xpose.msra.mxu0 %v455
      %542 = vmatprep.subr.mxu0 0.0
      %543 = vmatpush1.xpose.msra.mxu0 %v458
      %544 = vmatprep.subr.mxu0 0.0
      %545 = vmatpush1.xpose.msra.mxu0 %v461
      %546 = vmatprep.subr.mxu0 0.0
      %547 = vmatpush1.xpose.msra.mxu0 %v464
      %548 = vmatprep.subr.mxu0 0.0
      %549 = vmatpush1.xpose.msra.mxu0 %v467
      %550 = vmatprep.subr.mxu0 0.0
      %551 = vmatpush1.xpose.msra.mxu0 %v470
      %552 = vmatprep.subr.mxu0 0.0
      %553 = vmatpush1.xpose.msra.mxu0 %v473
      %554 = vmatprep.subr.mxu0 0.0
      %555 = vmatpush1.xpose.msra.mxu0 %v476
      %556 = vmatprep.subr.mxu0 0.0
      %557 = vmatpush1.xpose.msra.mxu0 %v479
      %558 = vmatprep.subr.mxu0 0.0
      %559 = vmatpush1.xpose.msra.mxu0 %v482
      %560 = vmatprep.subr.mxu0 0.0
      %561 = vmatpush1.xpose.msra.mxu0 %v485
      %562 = vmatprep.subr.mxu0 0.0
      %563 = vmatpush1.xpose.msra.mxu0 %v488
      %564 = vmatprep.subr.mxu0 0.0
      %565 = vmatpush1.xpose.msra.mxu0 %v491
      %566 = vmatprep.subr.mxu0 0.0
      %567 = vmatpush1.xpose.msra.mxu0 %v494
      %568 = vmatprep.subr.mxu0 0.0
      %569 = vmatpush1.xpose.msra.mxu0 %v497
      %570 = vmatprep.subr.mxu0 0.0
      %571 = vmatpush1.xpose.msra.mxu0 %v500
      %572 = vmatprep.subr.mxu0 0.0
      %573 = vmatpush1.xpose.msra.mxu0 %v503
      %574 = vmatprep.subr.mxu0 0.0
      %575 = vmatpush1.xpose.msra.mxu0 %v506
      %576 = vmatprep.subr.mxu0 0.0
      %577 = vmatpush1.xpose.msra.mxu0 %v509
      %578 = vmatprep.subr.mxu0 0.0
      %579 = vmatpush1.xpose.msra.mxu0 %v512
      %580 = vmatprep.subr.mxu0 0.0
      %581 = vmatpush1.xpose.msra.mxu0 %v515
      %582 = vmatprep.subr.mxu0 0.0
      %583 = vmatpush1.xpose.msra.mxu0 %v518
      %584 = vmatprep.mubr.f32.mxu0 0.0
      %585 = vmatmul.mubr.f32.gmra.mrb[0].mxu0 %v386
      %v586 = vpop.f32.mrb[0].mxu0
      %v587 = vadd.f32 %v280, %v586
      %v588 = vpop.f32.mrb[0].mxu0
      %v589 = vadd.f32 %v280, %v588
      %590 = vmatprep.mubr.f32.mxu0 0.0
      %591 = vmatmul.mubr.f32.gmra.mrb[0].mxu0 %v389
      %v592 = vpop.f32.mrb[0].mxu0
      %v593 = vadd.f32 %v285, %v592
      %v594 = vpop.f32.mrb[0].mxu0
      %v595 = vadd.f32 %v285, %v594
      %596 = vmatprep.mubr.f32.mxu0 0.0
      %597 = vmatmul.mubr.f32.gmra.mrb[0].mxu0 %v392
      %v598 = vpop.f32.mrb[0].mxu0
      %v599 = vadd.f32 %v290, %v598
      %v600 = vpop.f32.mrb[0].mxu0
      %v601 = vadd.f32 %v290, %v600
      %602 = vmatprep.mubr.f32.mxu0 0.0
      %603 = vmatmul.mubr.f32.gmra.mrb[0].mxu0 %v395
      %v604 = vpop.f32.mrb[0].mxu0
      %v605 = vadd.f32 %v295, %v604
      %v606 = vpop.f32.mrb[0].mxu0
      %v607 = vadd.f32 %v295, %v606
      %608 = vmatprep.mubr.f32.mxu0 0.0
      %609 = vmatmul.mubr.f32.gmra.mrb[0].mxu0 %v398
      %v610 = vpop.f32.mrb[0].mxu0
      %v611 = vadd.f32 %v300, %v610
      %v612 = vpop.f32.mrb[0].mxu0
      %v613 = vadd.f32 %v300, %v612
      %614 = vmatprep.mubr.f32.mxu0 0.0
      %615 = vmatmul.mubr.f32.gmra.mrb[0].mxu0 %v401
      %v616 = vpop.f32.mrb[0].mxu0
      %v617 = vadd.f32 %v305, %v616
      %v618 = vpop.f32.mrb[0].mxu0
      %v619 = vadd.f32 %v305, %v618
      %620 = vmatprep.mubr.f32.mxu0 0.0
      %621 = vmatmul.mubr.f32.gmra.mrb[0].mxu0 %v404
      %v622 = vpop.f32.mrb[0].mxu0
      %v623 = vadd.f32 %v310, %v622
      %v624 = vpop.f32.mrb[0].mxu0
      %v625 = vadd.f32 %v310, %v624
      %626 = vmatprep.mubr.f32.mxu0 0.0
      %627 = vmatmul.mubr.f32.gmra.mrb[0].mxu0 %v407
      %v628 = vpop.f32.mrb[0].mxu0
      %v629 = vadd.f32 %v315, %v628
      %v630 = vpop.f32.mrb[0].mxu0
      %v631 = vadd.f32 %v315, %v630
      %632 = vmatprep.mubr.f32.mxu0 0.0
      %633 = vmatmul.mubr.f32.gmra.mrb[0].mxu0 %v410
      %v634 = vpop.f32.mrb[0].mxu0
      %v635 = vadd.f32 %v320, %v634
      %v636 = vpop.f32.mrb[0].mxu0
      %v637 = vadd.f32 %v320, %v636
      %638 = vmatprep.mubr.f32.mxu0 0.0
      %639 = vmatmul.mubr.f32.gmra.mrb[0].mxu0 %v413
      %v640 = vpop.f32.mrb[0].mxu0
      %v641 = vadd.f32 %v325, %v640
      %v642 = vpop.f32.mrb[0].mxu0
      %v643 = vadd.f32 %v325, %v642
      %644 = vmatprep.mubr.f32.mxu0 0.0
      %645 = vmatmul.mubr.f32.gmra.mrb[0].mxu0 %v416
      %v646 = vpop.f32.mrb[0].mxu0
      %v647 = vadd.f32 %v330, %v646
      %v648 = vpop.f32.mrb[0].mxu0
      %v649 = vadd.f32 %v330, %v648
      %650 = vmatprep.mubr.f32.mxu0 0.0
      %651 = vmatmul.mubr.f32.gmra.mrb[0].mxu0 %v419
      %v652 = vpop.f32.mrb[0].mxu0
      %v653 = vadd.f32 %v335, %v652
      %v654 = vpop.f32.mrb[0].mxu0
      %v655 = vadd.f32 %v335, %v654
      %656 = vmatprep.mubr.f32.mxu0 0.0
      %657 = vmatmul.mubr.f32.gmra.mrb[0].mxu0 %v422
      %v658 = vpop.f32.mrb[0].mxu0
      %v659 = vadd.f32 %v340, %v658
      %v660 = vpop.f32.mrb[0].mxu0
      %v661 = vadd.f32 %v340, %v660
      %662 = vdwg.mxu0
      %v663 = vmax.f32 %v587, 0.0
      %v664 = vmax.f32 %v589, 0.0
      %v665 = vmax.f32 %v593, 0.0
      %v666 = vmax.f32 %v595, 0.0
      %v667 = vmax.f32 %v599, 0.0
      %v668 = vmax.f32 %v601, 0.0
      %v669 = vmax.f32 %v605, 0.0
      %v670 = vmax.f32 %v607, 0.0
      %v671 = vmax.f32 %v611, 0.0
      %v672 = vmax.f32 %v613, 0.0
      %v673 = vmax.f32 %v617, 0.0
      %v674 = vmax.f32 %v619, 0.0
      %v675 = vmax.f32 %v623, 0.0
      %v676 = vmax.f32 %v625, 0.0
      %v677 = vmax.f32 %v629, 0.0
      %v678 = vmax.f32 %v631, 0.0
      %v679 = vmax.f32 %v635, 0.0
      %v680 = vmax.f32 %v637, 0.0
      %v681 = vmax.f32 %v641, 0.0
      %v682 = vmax.f32 %v643, 0.0
      %v683 = vmax.f32 %v647, 0.0
      %v684 = vmax.f32 %v649, 0.0
      %v685 = vmax.f32 %v653, 0.0
      %v686 = vmax.f32 %v655, 0.0
      %v687 = vmax.f32 %v659, 0.0
      %v688 = vmax.f32 %v661, 0.0
      %vm689 = vcmask 850944
      %v691 = vsel %vm689, %v263, 0
      %693 = vmatprep.subr.mxu0 %v664
      %694 = vmatpush1.msra.mxu0 %v663
      %695 = vmatprep.subr.mxu0 %v666
      %696 = vmatpush1.msra.mxu0 %v665
      %697 = vmatprep.subr.mxu0 %v668
      %698 = vmatpush1.msra.mxu0 %v667
      %699 = vmatprep.subr.mxu0 %v670
      %700 = vmatpush1.msra.mxu0 %v669
      %701 = vmatprep.subr.mxu0 %v672
      %702 = vmatpush1.msra.mxu0 %v671
      %703 = vmatprep.subr.mxu0 %v674
      %704 = vmatpush1.msra.mxu0 %v673
      %705 = vmatprep.subr.mxu0 %v676
      %706 = vmatpush1.msra.mxu0 %v675
      %707 = vmatprep.subr.mxu0 %v678
      %708 = vmatpush1.msra.mxu0 %v677
      %709 = vmatprep.subr.mxu0 %v680
      %710 = vmatpush1.msra.mxu0 %v679
      %711 = vmatprep.subr.mxu0 %v682
      %712 = vmatpush1.msra.mxu0 %v681
      %713 = vmatprep.subr.mxu0 %v684
      %714 = vmatpush1.msra.mxu0 %v683
      %715 = vmatprep.subr.mxu0 %v686
      %716 = vmatpush1.msra.mxu0 %v685
      %717 = vmatprep.subr.mxu0 %v688
      %718 = vmatpush1.msra.mxu0 %v687
      %719 = vmatprep.subr.mxu0 0.0
      %720 = vmatpush1.msra.mxu0 0.0
      %721 = vmatprep.subr.mxu0 0.0
      %722 = vmatpush1.msra.mxu0 0.0
      %723 = vmatprep.subr.mxu0 0.0
      %724 = vmatpush1.msra.mxu0 0.0
      %725 = vmatprep.subr.mxu0 0.0
      %726 = vmatpush1.msra.mxu0 0.0
      %727 = vmatprep.subr.mxu0 0.0
      %728 = vmatpush1.msra.mxu0 0.0
      %729 = vmatprep.subr.mxu0 0.0
      %730 = vmatpush1.msra.mxu0 0.0
      %731 = vmatprep.subr.mxu0 0.0
      %732 = vmatpush1.msra.mxu0 0.0
      %733 = vmatprep.subr.mxu0 0.0
      %734 = vmatpush1.msra.mxu0 0.0
      %735 = vmatprep.subr.mxu0 0.0
      %736 = vmatpush1.msra.mxu0 0.0
      %737 = vmatprep.subr.mxu0 0.0
      %738 = vmatpush1.msra.mxu0 0.0
      %739 = vmatprep.subr.mxu0 0.0
      %740 = vmatpush1.msra.mxu0 0.0
      %741 = vmatprep.subr.mxu0 0.0
      %742 = vmatpush1.msra.mxu0 0.0
      %743 = vmatprep.subr.mxu0 0.0
      %744 = vmatpush1.msra.mxu0 0.0
      %745 = vmatprep.subr.mxu0 0.0
      %746 = vmatpush1.msra.mxu0 0.0
      %747 = vmatprep.subr.mxu0 0.0
      %748 = vmatpush1.msra.mxu0 0.0
      %749 = vmatprep.subr.mxu0 0.0
      %750 = vmatpush1.msra.mxu0 0.0
      %751 = vmatprep.subr.mxu0 0.0
      %752 = vmatpush1.msra.mxu0 0.0
      %753 = vmatprep.subr.mxu0 0.0
      %754 = vmatpush1.msra.mxu0 0.0
      %755 = vmatprep.subr.mxu0 0.0
      %756 = vmatpush1.msra.mxu0 0.0
      %757 = vmatprep.mubr.f32.mxu0 0.0
      %758 = vmatmul.mubr.f32.gmra.mrb[0].mxu0 %v691
      %v759 = vpop.f32.mrb[0].mxu0
      %v760 = vadd.f32 %v351, %v759
      %v761 = vpop.f32.mrb[0].mxu0
      %v762 = vadd.f32 %v351, %v761
      %763 = vdwg.mxu0
      %v766 = vcombine.low %v760, %v762
      %v768 = vunpack.c.l.s4 1966171168
      %v769 = vunpack.c.0.s8 %v768
      %v770 = vlaneseq
      %v771 = vshrl.u32 %v770, 7
      %v772 = vsub.s32 %v769, %v771
      %v773 = vrot.slane %v766, %v772
      %v775 = vunpack.c.l.s4 1966171168
      %v776 = vunpack.c.0.s8 %v775
      %v777 = vlaneseq
      %v778 = vshrl.u32 %v777, 7
      %v779 = vsub.s32 %v776, %v778
      %v780 = vrot.slane %v773, %v779
      %v782 = vlaneseq
      %vm783 = vcmp.ge.s32.totalorder %v782, 0
      %vm784 = vcmp.lt.s32.totalorder %v782, 256
      %vm785 = vmand %vm783, %vm784
      %786 = vst.msk [vmem:[%s248] sm:$0x3] %vm785, %v780
      %v787 = vld [vmem:[%s238 + $0x100] sm:$0xff]
      %v788 = vld [vmem:[%s238 + $0x108] sm:$0xff]
      %v789 = vld [vmem:[%s238 + $0x110] sm:$0xff]
      %v790 = vld [vmem:[%s238 + $0x118] sm:$0xff]
      %v791 = vld [vmem:[%s238 + $0x120] sm:$0xff]
      %v792 = vld [vmem:[%s238 + $0x128] sm:$0xff]
      %v793 = vld [vmem:[%s238 + $0x130] sm:$0xff]
      %v794 = vld [vmem:[%s238 + $0x138] sm:$0xff]
      %v795 = vld [vmem:[%s238 + $0x140] sm:$0xff]
      %v796 = vld [vmem:[%s238 + $0x148] sm:$0xff]
      %v797 = vld [vmem:[%s238 + $0x150] sm:$0xff]
      %v798 = vld [vmem:[%s238 + $0x158] sm:$0xff]
      %v799 = vld [vmem:[%s238 + $0x160] sm:$0xff]
      %v800 = vld [vmem:[%s238 + $0x168] sm:$0xff]
      %v801 = vld [vmem:[%s238 + $0x170] sm:$0xff]
      %v802 = vld [vmem:[%s238 + $0x178] sm:$0xff]
      %v803 = vld [vmem:[%s238 + $0x180] sm:$0xff]
      %v804 = vld [vmem:[%s238 + $0x188] sm:$0xff]
      %v805 = vld [vmem:[%s238 + $0x190] sm:$0xff]
      %v806 = vld [vmem:[%s238 + $0x198] sm:$0xff]
      %v807 = vld [vmem:[%s238 + $0x1a0] sm:$0xff]
      %v808 = vld [vmem:[%s238 + $0x1a8] sm:$0xff]
      %v809 = vld [vmem:[%s238 + $0x1b0] sm:$0xff]
      %v810 = vld [vmem:[%s238 + $0x1b8] sm:$0xff]
      %v811 = vld [vmem:[%s238 + $0x1c0] sm:$0xff]
      %v812 = vld [vmem:[%s238 + $0x1c8] sm:$0xff]
      %v813 = vld [vmem:[%s238 + $0x1d0] sm:$0xff]
      %v814 = vld [vmem:[%s238 + $0x1d8] sm:$0xff]
      %v815 = vld [vmem:[%s238 + $0x1e0] sm:$0xff]
      %v816 = vld [vmem:[%s238 + $0x1e8] sm:$0xff]
      %v817 = vld [vmem:[%s238 + $0x1f0] sm:$0xff]
      %v818 = vld [vmem:[%s238 + $0x1f8] sm:$0xff]
      %v820 = vsel %vm384, %v787, 0
      %v823 = vsel %vm384, %v788, 0
      %v826 = vsel %vm384, %v789, 0
      %v829 = vsel %vm384, %v790, 0
      %v832 = vsel %vm384, %v791, 0
      %v835 = vsel %vm384, %v792, 0
      %v838 = vsel %vm384, %v793, 0
      %v841 = vsel %vm384, %v794, 0
      %v844 = vsel %vm384, %v795, 0
      %v847 = vsel %vm384, %v796, 0
      %v850 = vsel %vm384, %v797, 0
      %v853 = vsel %vm384, %v798, 0
      %v856 = vsel %vm384, %v799, 0
      %v859 = vsel %vm384, %v800, 0
      %v862 = vsel %vm384, %v801, 0
      %v865 = vsel %vm384, %v802, 0
      %v868 = vsel %vm384, %v803, 0
      %v871 = vsel %vm384, %v804, 0
      %v874 = vsel %vm384, %v805, 0
      %v877 = vsel %vm384, %v806, 0
      %v880 = vsel %vm384, %v807, 0
      %v883 = vsel %vm384, %v808, 0
      %v886 = vsel %vm384, %v809, 0
      %v889 = vsel %vm384, %v810, 0
      %v892 = vsel %vm384, %v811, 0
      %v895 = vsel %vm384, %v812, 0
      %v898 = vsel %vm384, %v813, 0
      %v901 = vsel %vm384, %v814, 0
      %v904 = vsel %vm384, %v815, 0
      %v907 = vsel %vm384, %v816, 0
      %v910 = vsel %vm384, %v817, 0
      %v913 = vsel %vm384, %v818, 0
      %915 = vmatprep.subr.mxu0 0.0
      %916 = vmatpush1.xpose.msra.mxu0 %v820
      %917 = vmatprep.subr.mxu0 0.0
      %918 = vmatpush1.xpose.msra.mxu0 %v823
      %919 = vmatprep.subr.mxu0 0.0
      %920 = vmatpush1.xpose.msra.mxu0 %v826
      %921 = vmatprep.subr.mxu0 0.0
      %922 = vmatpush1.xpose.msra.mxu0 %v829
      %923 = vmatprep.subr.mxu0 0.0
      %924 = vmatpush1.xpose.msra.mxu0 %v832
      %925 = vmatprep.subr.mxu0 0.0
      %926 = vmatpush1.xpose.msra.mxu0 %v835
      %927 = vmatprep.subr.mxu0 0.0
      %928 = vmatpush1.xpose.msra.mxu0 %v838
      %929 = vmatprep.subr.mxu0 0.0
      %930 = vmatpush1.xpose.msra.mxu0 %v841
      %931 = vmatprep.subr.mxu0 0.0
      %932 = vmatpush1.xpose.msra.mxu0 %v844
      %933 = vmatprep.subr.mxu0 0.0
      %934 = vmatpush1.xpose.msra.mxu0 %v847
      %935 = vmatprep.subr.mxu0 0.0
      %936 = vmatpush1.xpose.msra.mxu0 %v850
      %937 = vmatprep.subr.mxu0 0.0
      %938 = vmatpush1.xpose.msra.mxu0 %v853
      %939 = vmatprep.subr.mxu0 0.0
      %940 = vmatpush1.xpose.msra.mxu0 %v856
      %941 = vmatprep.subr.mxu0 0.0
      %942 = vmatpush1.xpose.msra.mxu0 %v859
      %943 = vmatprep.subr.mxu0 0.0
      %944 = vmatpush1.xpose.msra.mxu0 %v862
      %945 = vmatprep.subr.mxu0 0.0
      %946 = vmatpush1.xpose.msra.mxu0 %v865
      %947 = vmatprep.subr.mxu0 0.0
      %948 = vmatpush1.xpose.msra.mxu0 %v868
      %949 = vmatprep.subr.mxu0 0.0
      %950 = vmatpush1.xpose.msra.mxu0 %v871
      %951 = vmatprep.subr.mxu0 0.0
      %952 = vmatpush1.xpose.msra.mxu0 %v874
      %953 = vmatprep.subr.mxu0 0.0
      %954 = vmatpush1.xpose.msra.mxu0 %v877
      %955 = vmatprep.subr.mxu0 0.0
      %956 = vmatpush1.xpose.msra.mxu0 %v880
      %957 = vmatprep.subr.mxu0 0.0
      %958 = vmatpush1.xpose.msra.mxu0 %v883
      %959 = vmatprep.subr.mxu0 0.0
      %960 = vmatpush1.xpose.msra.mxu0 %v886
      %961 = vmatprep.subr.mxu0 0.0
      %962 = vmatpush1.xpose.msra.mxu0 %v889
      %963 = vmatprep.subr.mxu0 0.0
      %964 = vmatpush1.xpose.msra.mxu0 %v892
      %965 = vmatprep.subr.mxu0 0.0
      %966 = vmatpush1.xpose.msra.mxu0 %v895
      %967 = vmatprep.subr.mxu0 0.0
      %968 = vmatpush1.xpose.msra.mxu0 %v898
      %969 = vmatprep.subr.mxu0 0.0
      %970 = vmatpush1.xpose.msra.mxu0 %v901
      %971 = vmatprep.subr.mxu0 0.0
      %972 = vmatpush1.xpose.msra.mxu0 %v904
      %973 = vmatprep.subr.mxu0 0.0
      %974 = vmatpush1.xpose.msra.mxu0 %v907
      %975 = vmatprep.subr.mxu0 0.0
      %976 = vmatpush1.xpose.msra.mxu0 %v910
      %977 = vmatprep.subr.mxu0 0.0
      %978 = vmatpush1.xpose.msra.mxu0 %v913
      %979 = vmatprep.mubr.f32.mxu0 0.0
      %980 = vmatmul.mubr.f32.gmra.mrb[0].mxu0 %v386
      %v981 = vpop.f32.mrb[0].mxu0
      %v982 = vadd.f32 %v280, %v981
      %v983 = vpop.f32.mrb[0].mxu0
      %v984 = vadd.f32 %v280, %v983
      %985 = vmatprep.mubr.f32.mxu0 0.0
      %986 = vmatmul.mubr.f32.gmra.mrb[0].mxu0 %v389
      %v987 = vpop.f32.mrb[0].mxu0
      %v988 = vadd.f32 %v285, %v987
      %v989 = vpop.f32.mrb[0].mxu0
      %v990 = vadd.f32 %v285, %v989
      %991 = vmatprep.mubr.f32.mxu0 0.0
      %992 = vmatmul.mubr.f32.gmra.mrb[0].mxu0 %v392
      %v993 = vpop.f32.mrb[0].mxu0
      %v994 = vadd.f32 %v290, %v993
      %v995 = vpop.f32.mrb[0].mxu0
      %v996 = vadd.f32 %v290, %v995
      %997 = vmatprep.mubr.f32.mxu0 0.0
      %998 = vmatmul.mubr.f32.gmra.mrb[0].mxu0 %v395
      %v999 = vpop.f32.mrb[0].mxu0
      %v1000 = vadd.f32 %v295, %v999
      %v1001 = vpop.f32.mrb[0].mxu0
      %v1002 = vadd.f32 %v295, %v1001
      %1003 = vmatprep.mubr.f32.mxu0 0.0
      %1004 = vmatmul.mubr.f32.gmra.mrb[0].mxu0 %v398
      %v1005 = vpop.f32.mrb[0].mxu0
      %v1006 = vadd.f32 %v300, %v1005
      %v1007 = vpop.f32.mrb[0].mxu0
      %v1008 = vadd.f32 %v300, %v1007
      %1009 = vmatprep.mubr.f32.mxu0 0.0
      %1010 = vmatmul.mubr.f32.gmra.mrb[0].mxu0 %v401
      %v1011 = vpop.f32.mrb[0].mxu0
      %v1012 = vadd.f32 %v305, %v1011
      %v1013 = vpop.f32.mrb[0].mxu0
      %v1014 = vadd.f32 %v305, %v1013
      %1015 = vmatprep.mubr.f32.mxu0 0.0
      %1016 = vmatmul.mubr.f32.gmra.mrb[0].mxu0 %v404
      %v1017 = vpop.f32.mrb[0].mxu0
      %v1018 = vadd.f32 %v310, %v1017
      %v1019 = vpop.f32.mrb[0].mxu0
      %v1020 = vadd.f32 %v310, %v1019
      %1021 = vmatprep.mubr.f32.mxu0 0.0
      %1022 = vmatmul.mubr.f32.gmra.mrb[0].mxu0 %v407
      %v1023 = vpop.f32.mrb[0].mxu0
      %v1024 = vadd.f32 %v315, %v1023
      %v1025 = vpop.f32.mrb[0].mxu0
      %v1026 = vadd.f32 %v315, %v1025
      %1027 = vmatprep.mubr.f32.mxu0 0.0
      %1028 = vmatmul.mubr.f32.gmra.mrb[0].mxu0 %v410
      %v1029 = vpop.f32.mrb[0].mxu0
      %v1030 = vadd.f32 %v320, %v1029
      %v1031 = vpop.f32.mrb[0].mxu0
      %v1032 = vadd.f32 %v320, %v1031
      %1033 = vmatprep.mubr.f32.mxu0 0.0
      %1034 = vmatmul.mubr.f32.gmra.mrb[0].mxu0 %v413
      %v1035 = vpop.f32.mrb[0].mxu0
      %v1036 = vadd.f32 %v325, %v1035
      %v1037 = vpop.f32.mrb[0].mxu0
      %v1038 = vadd.f32 %v325, %v1037
      %1039 = vmatprep.mubr.f32.mxu0 0.0
      %1040 = vmatmul.mubr.f32.gmra.mrb[0].mxu0 %v416
      %v1041 = vpop.f32.mrb[0].mxu0
      %v1042 = vadd.f32 %v330, %v1041
      %v1043 = vpop.f32.mrb[0].mxu0
      %v1044 = vadd.f32 %v330, %v1043
      %1045 = vmatprep.mubr.f32.mxu0 0.0
      %1046 = vmatmul.mubr.f32.gmra.mrb[0].mxu0 %v419
      %v1047 = vpop.f32.mrb[0].mxu0
      %v1048 = vadd.f32 %v335, %v1047
      %v1049 = vpop.f32.mrb[0].mxu0
      %v1050 = vadd.f32 %v335, %v1049
      %1051 = vmatprep.mubr.f32.mxu0 0.0
      %1052 = vmatmul.mubr.f32.gmra.mrb[0].mxu0 %v422
      %v1053 = vpop.f32.mrb[0].mxu0
      %v1054 = vadd.f32 %v340, %v1053
      %v1055 = vpop.f32.mrb[0].mxu0
      %v1056 = vadd.f32 %v340, %v1055
      %1057 = vdwg.mxu0
      %v1058 = vmax.f32 %v982, 0.0
      %v1059 = vmax.f32 %v984, 0.0
      %v1060 = vmax.f32 %v988, 0.0
      %v1061 = vmax.f32 %v990, 0.0
      %v1062 = vmax.f32 %v994, 0.0
      %v1063 = vmax.f32 %v996, 0.0
      %v1064 = vmax.f32 %v1000, 0.0
      %v1065 = vmax.f32 %v1002, 0.0
      %v1066 = vmax.f32 %v1006, 0.0
      %v1067 = vmax.f32 %v1008, 0.0
      %v1068 = vmax.f32 %v1012, 0.0
      %v1069 = vmax.f32 %v1014, 0.0
      %v1070 = vmax.f32 %v1018, 0.0
      %v1071 = vmax.f32 %v1020, 0.0
      %v1072 = vmax.f32 %v1024, 0.0
      %v1073 = vmax.f32 %v1026, 0.0
      %v1074 = vmax.f32 %v1030, 0.0
      %v1075 = vmax.f32 %v1032, 0.0
      %v1076 = vmax.f32 %v1036, 0.0
      %v1077 = vmax.f32 %v1038, 0.0
      %v1078 = vmax.f32 %v1042, 0.0
      %v1079 = vmax.f32 %v1044, 0.0
      %v1080 = vmax.f32 %v1048, 0.0
      %v1081 = vmax.f32 %v1050, 0.0
      %v1082 = vmax.f32 %v1054, 0.0
      %v1083 = vmax.f32 %v1056, 0.0
      %1084 = vmatprep.subr.mxu0 %v1059
      %1085 = vmatpush1.msra.mxu0 %v1058
      %1086 = vmatprep.subr.mxu0 %v1061
      %1087 = vmatpush1.msra.mxu0 %v1060
      %1088 = vmatprep.subr.mxu0 %v1063
      %1089 = vmatpush1.msra.mxu0 %v1062
      %1090 = vmatprep.subr.mxu0 %v1065
      %1091 = vmatpush1.msra.mxu0 %v1064
      %1092 = vmatprep.subr.mxu0 %v1067
      %1093 = vmatpush1.msra.mxu0 %v1066
      %1094 = vmatprep.subr.mxu0 %v1069
      %1095 = vmatpush1.msra.mxu0 %v1068
      %1096 = vmatprep.subr.mxu0 %v1071
      %1097 = vmatpush1.msra.mxu0 %v1070
      %1098 = vmatprep.subr.mxu0 %v1073
      %1099 = vmatpush1.msra.mxu0 %v1072
      %1100 = vmatprep.subr.mxu0 %v1075
      %1101 = vmatpush1.msra.mxu0 %v1074
      %1102 = vmatprep.subr.mxu0 %v1077
      %1103 = vmatpush1.msra.mxu0 %v1076
      %1104 = vmatprep.subr.mxu0 %v1079
      %1105 = vmatpush1.msra.mxu0 %v1078
      %1106 = vmatprep.subr.mxu0 %v1081
      %1107 = vmatpush1.msra.mxu0 %v1080
      %1108 = vmatprep.subr.mxu0 %v1083
      %1109 = vmatpush1.msra.mxu0 %v1082
      %1110 = vmatprep.subr.mxu0 0.0
      %1111 = vmatpush1.msra.mxu0 0.0
      %1112 = vmatprep.subr.mxu0 0.0
      %1113 = vmatpush1.msra.mxu0 0.0
      %1114 = vmatprep.subr.mxu0 0.0
      %1115 = vmatpush1.msra.mxu0 0.0
      %1116 = vmatprep.subr.mxu0 0.0
      %1117 = vmatpush1.msra.mxu0 0.0
      %1118 = vmatprep.subr.mxu0 0.0
      %1119 = vmatpush1.msra.mxu0 0.0
      %1120 = vmatprep.subr.mxu0 0.0
      %1121 = vmatpush1.msra.mxu0 0.0
      %1122 = vmatprep.subr.mxu0 0.0
      %1123 = vmatpush1.msra.mxu0 0.0
      %1124 = vmatprep.subr.mxu0 0.0
      %1125 = vmatpush1.msra.mxu0 0.0
      %1126 = vmatprep.subr.mxu0 0.0
      %1127 = vmatpush1.msra.mxu0 0.0
      %1128 = vmatprep.subr.mxu0 0.0
      %1129 = vmatpush1.msra.mxu0 0.0
      %1130 = vmatprep.subr.mxu0 0.0
      %1131 = vmatpush1.msra.mxu0 0.0
      %1132 = vmatprep.subr.mxu0 0.0
      %1133 = vmatpush1.msra.mxu0 0.0
      %1134 = vmatprep.subr.mxu0 0.0
      %1135 = vmatpush1.msra.mxu0 0.0
      %1136 = vmatprep.subr.mxu0 0.0
      %1137 = vmatpush1.msra.mxu0 0.0
      %1138 = vmatprep.subr.mxu0 0.0
      %1139 = vmatpush1.msra.mxu0 0.0
      %1140 = vmatprep.subr.mxu0 0.0
      %1141 = vmatpush1.msra.mxu0 0.0
      %1142 = vmatprep.subr.mxu0 0.0
      %1143 = vmatpush1.msra.mxu0 0.0
      %1144 = vmatprep.subr.mxu0 0.0
      %1145 = vmatpush1.msra.mxu0 0.0
      %1146 = vmatprep.subr.mxu0 0.0
      %1147 = vmatpush1.msra.mxu0 0.0
      %1148 = vmatprep.mubr.f32.mxu0 0.0
      %1149 = vmatmul.mubr.f32.gmra.mrb[0].mxu0 %v691
      %v1150 = vpop.f32.mrb[0].mxu0
      %v1151 = vadd.f32 %v351, %v1150
      %v1152 = vpop.f32.mrb[0].mxu0
      %v1153 = vadd.f32 %v351, %v1152
      %1154 = vdwg.mxu0
      %v1157 = vcombine.low %v1151, %v1153
      %v1159 = vunpack.c.l.s4 1966171168
      %v1160 = vunpack.c.0.s8 %v1159
      %v1161 = vlaneseq
      %v1162 = vshrl.u32 %v1161, 7
      %v1163 = vsub.s32 %v1160, %v1162
      %v1164 = vrot.slane %v1157, %v1163
      %v1166 = vunpack.c.l.s4 1966171168
      %v1167 = vunpack.c.0.s8 %v1166
      %v1168 = vlaneseq
      %v1169 = vshrl.u32 %v1168, 7
      %v1170 = vsub.s32 %v1167, %v1169
      %v1171 = vrot.slane %v1164, %v1170
      %s1173 = scalar_lea.vmem %s248, 2
      %1174 = vst.msk [vmem:[%s1173] sm:$0x3] %vm785, %v1171
      %s1175 = smul.u32 2, %s18
      %p1176 = scmp.lt.s32.totalorder %s1175, 3
      %s1177 = scalar_select %p1176, %s1175, 3
      %s1178 = smul.addr %s1177, 2
      %s1179 = scalar_lea.vmem %s5, %s1178
      // Predicated region
      $region41: #{attn_net_forward.1} parent=39 // pred_check
        %p1180 = pneg %p146
      $region42: #{attn_net_forward.1} parent=39 // pred_check_branch
        %1182 = sbr.rel (%p1180) target = $region44
      $region43: #{attn_net_forward.1} parent=39 // pred_region
        %s1183 = smul.u32 2, %s18
      $region44: #{attn_net_forward.1} parent=39 // pred_fallthru
        _
    $region40: #{attn_net_forward.1} parent=5 // pred_fallthru
      _
    %p1184 = scmp.le.s32.totalorder 2, %s13
    // Predicated region
    $region45: #{attn_net_forward.1} parent=5 // pred_check
      %p1185 = pneg %p1184
    $region46: #{attn_net_forward.1} parent=5 // pred_check_branch
      %1187 = sbr.rel (%p1185) target = $region48
    $region47: #{attn_net_forward.1} parent=5 // pred_region
      %s1188 = ssub.s32 %s13, 2
      // Predicated region
      $region49: #{attn_net_forward.1} parent=47 // pred_check
        %p1189 = pneg %p152
      $region50: #{attn_net_forward.1} parent=47 // pred_check_branch
        %1191 = sbr.rel (%p1189) target = $region52
      $region51: #{attn_net_forward.1} parent=47 // pred_region
        %s1192 = smul.u32 2, %s19
        %p1193 = scmp.lt.s32.totalorder %s1192, 3
        %s1194 = scalar_select %p1193, %s1192, 3
        %s1195 = smul.addr %s1194, 2
        %s1196 = scalar_lea.vmem %s5, %s1195
      $region52: #{attn_net_forward.1} parent=47 // pred_fallthru
        _
    $region48: #{attn_net_forward.1} parent=5 // pred_fallthru
      _
  $region6: #{attn_net_forward.1} parent=0 // loop_footer
    %s17 = sadd.s32 1, %s13
  $region7: #{attn_net_forward.1} parent=0 // loop_footer_branch
    %12 = sbr.rel target = $region3
  $region8: #{attn_net_forward.1} parent=0 // loop_exit
    _

</llo_original>
